<compile_context>
chip_gen: v7x
topology: tpu7x:2x2x1
jax: 0.10.0
libtpu: 0.0.40
codegen_flags: <defaults>
</compile_context>

<pallas_src>
import functools

import jax
import jax.numpy as jnp
from jax.experimental import pallas as pl
from jax.experimental.pallas import tpu as pltpu

_MAX_LANE = 1024                      # widest lane-dense slab we try
_TARGET_TILE_BYTES = 4 * 1024 * 1024  # ~4 MiB per (double-buffered) tile


# --------------------------------------------------------------------------
# Kernels
# --------------------------------------------------------------------------
def _kernel_const(x_ref, o_ref, *, aw, w, b):
    """Params baked in as compile-time constants (concrete python scalars)."""
    x = x_ref[...].astype(jnp.float32)
    # Fused PReLU + Linear(1,1): one select, one mul, one add.
    o_ref[...] = (x * jnp.where(x >= 0.0, w, aw) + b).astype(o_ref.dtype)


def _kernel_smem(params_ref, x_ref, o_ref):
    """Fallback for traced params: [alpha*w, w, b] lives in SMEM."""
    aw = params_ref[0]
    w = params_ref[1]
    b = params_ref[2]
    x = x_ref[...].astype(jnp.float32)
    o_ref[...] = (x * jnp.where(x >= 0.0, w, aw) + b).astype(o_ref.dtype)


# --------------------------------------------------------------------------
# Tiling helpers
# --------------------------------------------------------------------------
def _round_up(n, m):
    return ((n + m - 1) // m) * m


def _tile_rows(rows, lane, itemsize):
    """Rows per tile: ~4 MiB tiles, >=2 grid steps when there is enough data."""
    max_r = max(8, (_TARGET_TILE_BYTES // (lane * itemsize)) // 8 * 8)
    if rows <= 64:
        return rows                              # one block == full dim (legal)
    if rows <= 2 * max_r:
        # Split into (at least) two grid steps so both v7x TensorCores work.
        return min(max_r, _round_up(pl.cdiv(rows, 2), 8))
    return max_r


def _run_slab(slab, params):
    """Apply the elementwise kernel to a lane-dense (rows, lane) slab.

    `params` is either a tuple of python floats (alpha*w, w, b) -> baked into
    the kernel, or a (3,) f32 jax array -> routed through SMEM.
    """
    rows, lane = slab.shape
    itemsize = jnp.dtype(slab.dtype).itemsize
    tile_r = _tile_rows(rows, lane, itemsize)
    grid = (pl.cdiv(rows, tile_r),)              # partial last block is masked

    block_spec = pl.BlockSpec((tile_r, lane), lambda i: (i, 0))
    out_shape = jax.ShapeDtypeStruct(slab.shape, slab.dtype)
    cost = pl.CostEstimate(
        flops=2 * slab.size,
        transcendentals=0,
        bytes_accessed=2 * slab.size * itemsize,
    )
    compiler_params = pltpu.CompilerParams(
        # Purely elementwise / mem-bound: let v7x's two TensorCores split the
        # row grid; harmless on single-core v5e/v6e.
        dimension_semantics=("parallel",),
        # 4 x ~4 MiB double buffers; raise v5e's 16 MiB default scoped VMEM.
        vmem_limit_bytes=32 * 1024 * 1024,
    )

    if isinstance(params, tuple):
        aw, w, b = params
        kernel = functools.partial(_kernel_const, aw=aw, w=w, b=b)
        return pl.pallas_call(
            kernel,
            out_shape=out_shape,
            grid_spec=pltpu.PrefetchScalarGridSpec(
                num_scalar_prefetch=0,
                grid=grid,
                in_specs=[block_spec],
                out_specs=block_spec,
            ),
            compiler_params=compiler_params,
            cost_estimate=cost,
        )(slab)

    # Traced params: one tiny SMEM operand, loaded once per grid step.
    return pl.pallas_call(
        _kernel_smem,
        out_shape=out_shape,
        grid_spec=pltpu.PrefetchScalarGridSpec(
            num_scalar_prefetch=0,
            grid=grid,
            in_specs=[
                pl.BlockSpec(memory_space=pltpu.MemorySpace.SMEM),
                block_spec,
            ],
            out_specs=block_spec,
        ),
        compiler_params=compiler_params,
        cost_estimate=cost,
    )(params, slab)


def _scalarize(p):
    """Return a python float for concrete scalar-ish params, else None."""
    try:
        arr = jnp.asarray(p)
    except Exception:
        return None
    if arr.size != 1:
        return None
    try:
        return float(arr.reshape(()))
    except Exception:            # traced value (inside jit) -> SMEM fallback
        return None


# --------------------------------------------------------------------------
# Public wrapper (== PercentileOutputLayer.forward)
# --------------------------------------------------------------------------
def percentile_output_layer(x, alpha, weight, bias):
    """y = Linear(1,1)(PReLU(x)) == x * (x>=0 ? w : alpha*w) + b, elementwise.

    x: any shape with trailing dim of size 1 (matching nn.Linear(1, 1)).
    alpha / weight / bias: scalars or size-1 arrays (PReLU's (1,) weight,
    Linear(1,1)'s (1,1) weight and (1,) bias all accepted).
    """
    orig_shape = x.shape
    assert orig_shape[-1] == 1, "Linear(1, 1) expects a trailing dim of size 1"
    total = x.size

    af, wf, bf = _scalarize(alpha), _scalarize(weight), _scalarize(bias)
    if af is not None and wf is not None and bf is not None:
        params = (af * wf, wf, bf)               # compile-time constants

        def tail_fn(t):
            t32 = t.astype(jnp.float32)
            return (t32 * jnp.where(t32 >= 0.0, wf, af * wf) + bf).astype(t.dtype)
    else:
        a = jnp.asarray(alpha, jnp.float32).reshape(())
        w = jnp.asarray(weight, jnp.float32).reshape(())
        b = jnp.asarray(bias, jnp.float32).reshape(())
        params = jnp.stack([a * w, w, b])

        def tail_fn(t):
            t32 = t.astype(jnp.float32)
            return (t32 * jnp.where(t32 >= 0.0, w, a * w) + b).astype(t.dtype)

    flat = x.reshape(-1)
    if total == 0:
        return flat.reshape(orig_shape)

    # ---- fast path: zero-copy reshape in/out (no pad, no slice) ------------
    for lane in range(_MAX_LANE, 0, -128):       # 1024, 896, ..., 128
        if total % lane == 0:
            out = _run_slab(flat.reshape(total // lane, lane), params)
            return out.reshape(orig_shape)

    # ---- ragged path: kernel on the 128-aligned prefix, tiny jnp tail ------
    # (The prefix slice + final concat still copy; only the <128-element tail
    #  is computed outside the kernel.)
    main = (total // 128) * 128
    if main == 0:
        # Fewer than 128 elements total: not worth a pallas_call.
        return tail_fn(flat).reshape(orig_shape)
    head = _run_slab(flat[:main].reshape(main // 128, 128), params).reshape(-1)
    tail = tail_fn(flat[main:])
    return jnp.concatenate([head, tail]).reshape(orig_shape)


# --------------------------------------------------------------------------
# Demo / self-test
# --------------------------------------------------------------------------
if __name__ == "__main__":
    # Deterministic "parameters" (synthetic init, matching module shapes):
    #   nn.PReLU()      -> single slope parameter (PyTorch default 0.25)
    #   nn.Linear(1, 1) -> scalar weight, scalar bias
    alpha = 0.25
    weight = 0.5
    bias = -0.1

    def ref_fn(x):
        return jnp.where(x >= 0, x, alpha * x) * weight + bias

    key = jax.random.PRNGKey(0)
    k1, k2, k3 = jax.random.split(key, 3)

    # 1) Small shape consistent with the module (B, C, H, 1): 128 elements,
    #    hits the zero-copy lane-aligned fast path.
    x = jax.random.normal(k1, (2, 4, 16, 1), dtype=jnp.float32)
    y = jax.block_until_ready(percentile_output_layer(x, alpha, weight, bias))
    assert y.shape == x.shape
    assert jnp.allclose(y, ref_fn(x), atol=1e-6, rtol=1e-6)

    # 2) Odd-sized input (3*5*77 = 1155 elements): exercises the aligned
    #    prefix + tiny tail path (no whole-tensor pad/slice).
    x2 = jax.random.normal(k2, (3, 5, 77, 1), dtype=jnp.float32)
    y2 = jax.block_until_ready(percentile_output_layer(x2, alpha, weight, bias))
    assert y2.shape == x2.shape
    assert jnp.allclose(y2, ref_fn(x2), atol=1e-6, rtol=1e-6)

    # 3) Module-style (1,1)/(1,)-shaped params, jitted with traced params:
    #    exercises the SMEM fallback path.
    x3 = jax.random.normal(k3, (2, 4, 16, 1), dtype=jnp.float32)
    a_arr = jnp.full((1,), alpha, dtype=jnp.float32)       # PReLU weight
    w_arr = jnp.full((1, 1), weight, dtype=jnp.float32)    # Linear(1,1) weight
    b_arr = jnp.full((1,), bias, dtype=jnp.float32)        # Linear(1,1) bias
    y3 = jax.jit(percentile_output_layer)(x3, a_arr, w_arr, b_arr)
    y3 = jax.block_until_ready(y3)
    assert y3.shape == x3.shape
    assert jnp.allclose(y3, ref_fn(x3), atol=1e-6, rtol=1e-6)

    print("KERNEL_OK")
</pallas_src>

<mosaic_0001>
module attributes {stable_mosaic.version = 11 : i64} {
  func.func @_kernel_const(%arg0: i32, %arg1: memref<1x128xf32, #tpu.memory_space<vmem>>, %arg2: memref<1x128xf32, #tpu.memory_space<vmem>>) attributes {dimension_semantics = [#tpu.dimension_semantics<parallel>], iteration_bounds = array<i64: 1>, scalar_prefetch = 0 : i64, scratch_operands = 0 : i64, tpu.core_type = #tpu.core_type<tc>, window_params = [{transform_indices = @transform_0, window_bounds = array<i64: 1, 128>}, {transform_indices = @transform_1, window_bounds = array<i64: 1, 128>}]} {
    %c0 = arith.constant 0 : index
    %c0_0 = arith.constant 0 : index
    %0 = vector.load %arg1[%c0, %c0_0] : memref<1x128xf32, #tpu.memory_space<vmem>>, vector<1x128xf32>
    %cst = arith.constant 0.000000e+00 : f32
    %1 = vector.broadcast %cst : f32 to vector<1x128xf32>
    %2 = arith.cmpf oge, %0, %1 : vector<1x128xf32>
    %cst_1 = arith.constant 5.000000e-01 : f32
    %cst_2 = arith.constant 1.250000e-01 : f32
    %3 = vector.broadcast %cst_1 : f32 to vector<1x128xf32>
    %4 = vector.broadcast %cst_2 : f32 to vector<1x128xf32>
    %5 = arith.select %2, %3, %4 : vector<1x128xi1>, vector<1x128xf32>
    %6 = arith.mulf %0, %5 : vector<1x128xf32>
    %cst_3 = arith.constant -1.000000e-01 : f32
    %7 = vector.broadcast %cst_3 : f32 to vector<1x128xf32>
    %8 = arith.addf %6, %7 : vector<1x128xf32>
    %c0_4 = arith.constant 0 : index
    %c0_5 = arith.constant 0 : index
    %9 = vector.load %arg2[%c0_4, %c0_5] : memref<1x128xf32, #tpu.memory_space<vmem>>, vector<1x128xf32>
    tpu.vector_store %arg2[%c0_4, %c0_5], %8 {strides = array<i32>} : memref<1x128xf32, #tpu.memory_space<vmem>>, vector<1x128xf32>,
    return
  }
  func.func @transform_0(%arg0: i32) -> (i32, i32) {
    %c0_i32 = arith.constant 0 : i32
    %c0_i32_0 = arith.constant 0 : i32
    return %arg0, %c0_i32 : i32, i32
  }
  func.func @transform_1(%arg0: i32) -> (i32, i32) {
    %c0_i32 = arith.constant 0 : i32
    %c0_i32_0 = arith.constant 0 : i32
    return %arg0, %c0_i32 : i32, i32
  }
}

</mosaic_0001>

<llo_original>
// kernel: tpu_custom_call.1
$region0: #{tpu_custom_call.1}
  #allocation0 [shape = 'u32[]', space=smem, size = 0x4, offset = 0x4, fixed_abs, tag = 'smem constant byte address 0x4 - core index']
  #allocation1 [shape = 'u32[144,128]{1,0:T(1,128)}', space=vmem, size = 0x12000, scoped, tag = 'internal scratch']
  %s0 = inlined_call_operand.hbm [shape: f32[1,128], index: 0, kind: input, shape index: {}]
  %s1 = inlined_call_operand.hbm [shape: f32[1,128], index: 1, kind: output, shape index: {}]
  %s2 = sld [smem:[#allocation0]]
  $region18: #{tpu_custom_call.1} parent=0
    _
  %s4 = ssub.s32 1, %s2
  %s5 = scalar_select 0, %s4, %s2
  $region1: #{tpu_custom_call.1} parent=0
    #allocation2 [shape = 'u8[512]{0}', space=vmem, size = 0x400, scoped, tag = 'input window, operand 0, single buffered']
    #allocation3 [shape = 's32[1]{0}', space=sflag, size = 0x4, scoped, tag = 'scoped memory for tpu_custom_call.1']
    #allocation4 [shape = 's32[1]{0}', space=sflag, size = 0x4, scoped, tag = 'scoped memory for tpu_custom_call.1']
    #allocation5 [shape = 'u8[512]{0}', space=vmem, size = 0x400, scoped, tag = 'output window, operand 0, single buffered']
    %6 = vsyncpa [#allocation3], 0
    %7 = vsyncpa [#allocation4], 0
    // Predicated region
    $region2: #{tpu_custom_call.1} parent=1 // pred_check
      _
    $region3: #{tpu_custom_call.1} parent=1 // pred_check_branch
      %9 = sbr.rel (0) target = $region5
    $region4: #{tpu_custom_call.1} parent=1 // pred_region
      %s11 = ssub.s32 16, 16
      %12 = vsyncadd [#allocation3], %s11
      %s14 = sshll.u32 [#allocation2], 4
      %s15 = int_to_ptr.vmem [resolvable:$true] %s14
      %17 = dma.hbm_to_vmem [thread:$0]  %s0, 16, %s15, [#allocation3]
    $region5: #{tpu_custom_call.1} parent=1 // pred_fallthru
      _
    // Predicated region
    $region6: #{tpu_custom_call.1} parent=1 // pred_check
      _
    $region7: #{tpu_custom_call.1} parent=1 // pred_check_branch
      %19 = sbr.rel (0) target = $region9
    $region8: #{tpu_custom_call.1} parent=1 // pred_region
      %20 = dma.done [#allocation3], 16
    $region9: #{tpu_custom_call.1} parent=1 // pred_fallthru
      _
    %v21 = vld [vmem:[#allocation2] sm:$0x1]
    %vm22 = vcmp.ge.f32.partialorder %v21, 0.0
    %v23 = vsel %vm22, 0.5, 0.125
    %v24 = vmul.f32 %v21, %v23
    %v25 = vadd.f32 %v24, -0.1
    %26 = vst [vmem:[#allocation5] sm:$0x1] %v25
    // Predicated region
    $region10: #{tpu_custom_call.1} parent=1 // pred_check
      _
    $region11: #{tpu_custom_call.1} parent=1 // pred_check_branch
      %28 = sbr.rel (0) target = $region13
    $region12: #{tpu_custom_call.1} parent=1 // pred_region
      %s30 = ssub.s32 16, 16
      %31 = vsyncadd [#allocation4], %s30
      %s33 = sshll.u32 [#allocation5], 4
      %s34 = int_to_ptr.vmem [resolvable:$true] %s33
      %36 = dma.vmem_to_hbm [thread:$0]  %s34, 16, %s1, [#allocation4]
    $region13: #{tpu_custom_call.1} parent=1 // pred_fallthru
      _
    // Predicated region
    $region14: #{tpu_custom_call.1} parent=1 // pred_check
      _
    $region15: #{tpu_custom_call.1} parent=1 // pred_check_branch
      %38 = sbr.rel (0) target = $region17
    $region16: #{tpu_custom_call.1} parent=1 // pred_region
      %39 = dma.done [#allocation4], 16
    $region17: #{tpu_custom_call.1} parent=1 // pred_fallthru
      _
    %40 = vsyncpa [#allocation3], 1
    %41 = vsyncpa [#allocation4], 1

</llo_original>
